<compile_context>
chip_gen: v7x
topology: tpu7x:2x2x1
jax: 0.10.0
libtpu: 0.0.40
codegen_flags: <defaults>
</compile_context>

<pallas_src>
import jax
import jax.numpy as jnp
from jax import lax
from jax.experimental import pallas as pl
from jax.experimental.pallas import tpu as pltpu

# ----- model hyper-params (consistent with the module's __init__) -----
VOCAB_SIZE    = 32
EMBEDDING_DIM = 16
HIDDEN_SIZE   = 32
OUTPUT_SIZE   = 8
DENSE_FEATS   = 64          # fixed by the forward: x[:, :64]
BAG_LEN       = 8           # number of index columns per row
BATCH         = 128         # small demo batch


def _fused_kernel(xt_ref, idx_ref, w1_ref, b1_ref, w2_ref, b2_ref, out_ref):
    """Feature-major fused forward for one batch tile.

    xt_ref : (64, TB)   f32   dense features, transposed (feature-major)
    idx_ref: (L, TB)    int32 bag indices, transposed
    w1_ref : (H, 64+V)  f32   [W1_dense | W1_emb @ table^T / L]
    b1_ref : (H, 1)     f32
    w2_ref : (O, H)     f32
    b2_ref : (O, 1)     f32
    out_ref: (O, TB)    f32   sigmoid output, feature-major (lane-dense store)
    """
    tb = xt_ref.shape[1]
    n_bag = idx_ref.shape[0]                              # L
    vocab = w1_ref.shape[1] - DENSE_FEATS                 # V

    idx = idx_ref[...]                                    # (L, TB) int32

    # counts_T[v, b] = #{l : idx[l, b] == v}.  Lane-dense (V, TB) layout:
    # each unrolled step compares one (1, TB) index row (sublane splat) against
    # a sublane iota — pure VPU, no (B, L, V) intermediate, no XLU reduce.
    iota_v = lax.broadcasted_iota(jnp.int32, (vocab, tb), 0)
    counts = jnp.zeros((vocab, tb), jnp.float32)
    for l in range(n_bag):                                # static unroll, L == 8
        counts = counts + (iota_v == idx[l:l + 1, :]).astype(jnp.float32)

    # feat_T = [x_dense^T ; counts^T]  -> (64+V, TB); the concat is along the
    # sublane axis at an 8-aligned boundary, feeding one fused K=96 MXU pass.
    feat_t = jnp.concatenate([xt_ref[...], counts], axis=0)

    # Hidden layer (EmbeddingBag mean already folded into w1_ref in the wrapper).
    h_t = jnp.dot(w1_ref[...], feat_t,
                  preferred_element_type=jnp.float32)     # (H, TB)
    h_t = jnp.maximum(h_t + b1_ref[...], 0.0)             # bias + ReLU

    # Dropout is identity at inference time.
    # TODO(synk): training-mode dropout (random mask + 1/(1-p) scale) not applied.

    out_t = jnp.dot(w2_ref[...], h_t,
                    preferred_element_type=jnp.float32)   # (O, TB)
    out_ref[...] = jax.nn.sigmoid(out_t + b2_ref[...])


def embedding_bag_model_v2(x, emb_table, w1, b1, w2, b2, *, tile_b=None):
    """x: (B, 64+L) f32.  emb_table: (V, E).  w1: (H, 64+E), w2: (O, H) torch layout."""
    B, F = x.shape
    L = F - DENSE_FEATS
    V, _E = emb_table.shape
    H = w1.shape[0]
    O = w2.shape[0]

    # ----- input layout prep (XLA side, fused under the caller's jit) -----
    x_dense_t = jnp.transpose(x[:, :DENSE_FEATS])                    # (64, B) f32
    idx_t = jnp.transpose(x[:, DENSE_FEATS:]).astype(jnp.int32)      # (L, B)  int32 (.to(torch.int))

    # ----- one-time weight prep -----
    # Fold the embedding gather + mean into dense1:
    #   h^T = W1_dense @ x1^T + (W1_emb @ table^T / L) @ counts^T + b1
    w1_fused = jnp.concatenate(
        [w1[:, :DENSE_FEATS],
         jnp.dot(w1[:, DENSE_FEATS:], jnp.transpose(emb_table)) / jnp.float32(L)],
        axis=1)                                                       # (H, 64+V)
    b1_col = b1.reshape(H, 1)
    b2_col = b2.reshape(O, 1)

    # Single batch tile by default (grid of 1): kernel is overhead-bound and
    # the full problem fits VMEM with huge margin on every TPU generation.
    tb = B if tile_b is None else min(tile_b, B)
    grid = (pl.cdiv(B, tb),)

    def resident(shape):
        # Weights/biases stay VMEM-resident across all batch tiles.
        return pl.BlockSpec(shape, lambda i: (0, 0))

    cost = pl.CostEstimate(
        flops=2 * B * ((DENSE_FEATS + V) * H + H * O),
        transcendentals=B * O,                                        # sigmoid
        bytes_accessed=4 * (x_dense_t.size + idx_t.size + B * O
                            + w1_fused.size + w2.size + H + O),
    )

    out_t = pl.pallas_call(
        _fused_kernel,
        out_shape=jax.ShapeDtypeStruct((O, B), jnp.float32),
        grid=grid,
        in_specs=[
            pl.BlockSpec((DENSE_FEATS, tb), lambda i: (0, i)),        # x_dense^T, batch-tiled
            pl.BlockSpec((L, tb), lambda i: (0, i)),                  # idx^T, batch-tiled
            resident((H, DENSE_FEATS + V)),                           # fused W1
            resident((H, 1)),                                         # b1 column
            resident((O, H)),                                         # W2 (torch layout)
            resident((O, 1)),                                         # b2 column
        ],
        out_specs=pl.BlockSpec((O, tb), lambda i: (0, i)),            # lane-dense store
        compiler_params=pltpu.CompilerParams(
            dimension_semantics=("parallel",)),
        cost_estimate=cost,
    )(x_dense_t, idx_t, w1_fused, b1_col, w2, b2_col)

    # (O, B) -> (B, O); stays inside the surrounding jit, no standalone dispatch.
    return jnp.transpose(out_t)


def _reference(x, emb_table, w1, b1, w2, b2):
    """Pure-JAX reference mirroring the PyTorch module."""
    x1 = x[:, :DENSE_FEATS]
    idx = x[:, DENSE_FEATS:].astype(jnp.int32)
    emb = jnp.mean(emb_table[idx], axis=1)
    feat = jnp.concatenate([x1, emb], axis=1)
    h = jnp.maximum(feat @ w1.T + b1, 0.0)
    return jax.nn.sigmoid(h @ w2.T + b2)


if __name__ == "__main__":
    key = jax.random.PRNGKey(0)
    k_dense, k_idx, k_emb, k_w1, k_b1, k_w2, k_b2 = jax.random.split(key, 7)

    # Deterministic synthetic parameters (no checkpoint load).
    emb_table = jax.random.normal(k_emb, (VOCAB_SIZE, EMBEDDING_DIM),
                                  jnp.float32) * 0.1
    w1 = jax.random.normal(k_w1, (HIDDEN_SIZE, DENSE_FEATS + EMBEDDING_DIM),
                           jnp.float32) * 0.1
    b1 = jax.random.normal(k_b1, (HIDDEN_SIZE,), jnp.float32) * 0.1
    w2 = jax.random.normal(k_w2, (OUTPUT_SIZE, HIDDEN_SIZE),
                           jnp.float32) * 0.1
    b2 = jax.random.normal(k_b2, (OUTPUT_SIZE,), jnp.float32) * 0.1

    # Input: dense float features + integer indices stored as floats.
    x_dense = jax.random.normal(k_dense, (BATCH, DENSE_FEATS), jnp.float32)
    x_idx = jax.random.randint(k_idx, (BATCH, BAG_LEN), 0,
                               VOCAB_SIZE).astype(jnp.float32)
    x = jnp.concatenate([x_dense, x_idx], axis=1)        # (B, 64 + L)

    fwd = jax.jit(embedding_bag_model_v2)                # prep + kernel + transpose in one jit
    out = jax.block_until_ready(fwd(x, emb_table, w1, b1, w2, b2))

    ref = _reference(x, emb_table, w1, b1, w2, b2)
    assert out.shape == (BATCH, OUTPUT_SIZE)
    err = float(jnp.max(jnp.abs(out - ref)))
    assert jnp.allclose(out, ref, atol=1e-4, rtol=1e-4), err

    print("KERNEL_OK")
</pallas_src>

<mosaic_0001>
module attributes {stable_mosaic.version = 11 : i64} {
  func.func @_fused_kernel(%arg0: i32, %arg1: memref<64x128xf32, #tpu.memory_space<vmem>>, %arg2: memref<8x128xi32, #tpu.memory_space<vmem>>, %arg3: memref<32x96xf32, #tpu.memory_space<vmem>>, %arg4: memref<32x1xf32, #tpu.memory_space<vmem>>, %arg5: memref<8x32xf32, #tpu.memory_space<vmem>>, %arg6: memref<8x1xf32, #tpu.memory_space<vmem>>, %arg7: memref<8x128xf32, #tpu.memory_space<vmem>>) attributes {dimension_semantics = [#tpu.dimension_semantics<parallel>], iteration_bounds = array<i64: 1>, scalar_prefetch = 0 : i64, scratch_operands = 0 : i64, tpu.core_type = #tpu.core_type<tc>, window_params = [{transform_indices = @transform_0, window_bounds = array<i64: 64, 128>}, {transform_indices = @transform_1, window_bounds = array<i64: 8, 128>}, {pipeline_mode = #tpu.pipeline_mode<synchronous>, transform_indices = @transform_2, window_bounds = array<i64: 32, 96>}, {pipeline_mode = #tpu.pipeline_mode<synchronous>, transform_indices = @transform_3, window_bounds = array<i64: 32, 1>}, {pipeline_mode = #tpu.pipeline_mode<synchronous>, transform_indices = @transform_4, window_bounds = array<i64: 8, 32>}, {pipeline_mode = #tpu.pipeline_mode<synchronous>, transform_indices = @transform_5, window_bounds = array<i64: 8, 1>}, {transform_indices = @transform_6, window_bounds = array<i64: 8, 128>}]} {
    %c0 = arith.constant 0 : index
    %c0_0 = arith.constant 0 : index
    %0 = vector.load %arg2[%c0, %c0_0] : memref<8x128xi32, #tpu.memory_space<vmem>>, vector<8x128xi32>
    %1 = tpu.iota {dimensions = array<i32: 0>} : vector<32x128xi32>
    %cst = arith.constant 0.000000e+00 : f32
    %2 = vector.broadcast %cst : f32 to vector<32x128xf32>
    %3 = vector.extract_strided_slice %0 {offsets = [0, 0], sizes = [1, 128], strides = [1, 1]} : vector<8x128xi32> to vector<1x128xi32>
    %4 = vector.broadcast %3 : vector<1x128xi32> to vector<32x128xi32>
    %5 = arith.cmpi eq, %1, %4 : vector<32x128xi32>
    %6 = arith.extui %5 : vector<32x128xi1> to vector<32x128xi32>
    %7 = arith.sitofp %6 : vector<32x128xi32> to vector<32x128xf32>
    %8 = arith.addf %2, %7 : vector<32x128xf32>
    %9 = vector.extract_strided_slice %0 {offsets = [1, 0], sizes = [1, 128], strides = [1, 1]} : vector<8x128xi32> to vector<1x128xi32>
    %10 = vector.broadcast %9 : vector<1x128xi32> to vector<32x128xi32>
    %11 = arith.cmpi eq, %1, %10 : vector<32x128xi32>
    %12 = arith.extui %11 : vector<32x128xi1> to vector<32x128xi32>
    %13 = arith.sitofp %12 : vector<32x128xi32> to vector<32x128xf32>
    %14 = arith.addf %8, %13 : vector<32x128xf32>
    %15 = vector.extract_strided_slice %0 {offsets = [2, 0], sizes = [1, 128], strides = [1, 1]} : vector<8x128xi32> to vector<1x128xi32>
    %16 = vector.broadcast %15 : vector<1x128xi32> to vector<32x128xi32>
    %17 = arith.cmpi eq, %1, %16 : vector<32x128xi32>
    %18 = arith.extui %17 : vector<32x128xi1> to vector<32x128xi32>
    %19 = arith.sitofp %18 : vector<32x128xi32> to vector<32x128xf32>
    %20 = arith.addf %14, %19 : vector<32x128xf32>
    %21 = vector.extract_strided_slice %0 {offsets = [3, 0], sizes = [1, 128], strides = [1, 1]} : vector<8x128xi32> to vector<1x128xi32>
    %22 = vector.broadcast %21 : vector<1x128xi32> to vector<32x128xi32>
    %23 = arith.cmpi eq, %1, %22 : vector<32x128xi32>
    %24 = arith.extui %23 : vector<32x128xi1> to vector<32x128xi32>
    %25 = arith.sitofp %24 : vector<32x128xi32> to vector<32x128xf32>
    %26 = arith.addf %20, %25 : vector<32x128xf32>
    %27 = vector.extract_strided_slice %0 {offsets = [4, 0], sizes = [1, 128], strides = [1, 1]} : vector<8x128xi32> to vector<1x128xi32>
    %28 = vector.broadcast %27 : vector<1x128xi32> to vector<32x128xi32>
    %29 = arith.cmpi eq, %1, %28 : vector<32x128xi32>
    %30 = arith.extui %29 : vector<32x128xi1> to vector<32x128xi32>
    %31 = arith.sitofp %30 : vector<32x128xi32> to vector<32x128xf32>
    %32 = arith.addf %26, %31 : vector<32x128xf32>
    %33 = vector.extract_strided_slice %0 {offsets = [5, 0], sizes = [1, 128], strides = [1, 1]} : vector<8x128xi32> to vector<1x128xi32>
    %34 = vector.broadcast %33 : vector<1x128xi32> to vector<32x128xi32>
    %35 = arith.cmpi eq, %1, %34 : vector<32x128xi32>
    %36 = arith.extui %35 : vector<32x128xi1> to vector<32x128xi32>
    %37 = arith.sitofp %36 : vector<32x128xi32> to vector<32x128xf32>
    %38 = arith.addf %32, %37 : vector<32x128xf32>
    %39 = vector.extract_strided_slice %0 {offsets = [6, 0], sizes = [1, 128], strides = [1, 1]} : vector<8x128xi32> to vector<1x128xi32>
    %40 = vector.broadcast %39 : vector<1x128xi32> to vector<32x128xi32>
    %41 = arith.cmpi eq, %1, %40 : vector<32x128xi32>
    %42 = arith.extui %41 : vector<32x128xi1> to vector<32x128xi32>
    %43 = arith.sitofp %42 : vector<32x128xi32> to vector<32x128xf32>
    %44 = arith.addf %38, %43 : vector<32x128xf32>
    %45 = vector.extract_strided_slice %0 {offsets = [7, 0], sizes = [1, 128], strides = [1, 1]} : vector<8x128xi32> to vector<1x128xi32>
    %46 = vector.broadcast %45 : vector<1x128xi32> to vector<32x128xi32>
    %47 = arith.cmpi eq, %1, %46 : vector<32x128xi32>
    %48 = arith.extui %47 : vector<32x128xi1> to vector<32x128xi32>
    %49 = arith.sitofp %48 : vector<32x128xi32> to vector<32x128xf32>
    %50 = arith.addf %44, %49 : vector<32x128xf32>
    %c0_1 = arith.constant 0 : index
    %c0_2 = arith.constant 0 : index
    %51 = vector.load %arg1[%c0_1, %c0_2] : memref<64x128xf32, #tpu.memory_space<vmem>>, vector<64x128xf32>
    %52 = tpu.concatenate %51, %50 in 0 : vector<64x128xf32>, vector<32x128xf32> -> vector<96x128xf32>
    %c0_3 = arith.constant 0 : index
    %c0_4 = arith.constant 0 : index
    %53 = vector.load %arg3[%c0_3, %c0_4] : memref<32x96xf32, #tpu.memory_space<vmem>>, vector<32x96xf32>
    %cst_5 = arith.constant dense<0.000000e+00> : vector<32x128xf32>
    %54 = tpu.matmul %53, %52, %cst_5 {dimension_numbers = #tpu.dot_dimension_numbers<[1], [0], [0], [1], [0, 0, 1, 1], [], []>} : vector<32x96xf32>, vector<96x128xf32>, vector<32x128xf32> -> vector<32x128xf32>
    %c0_6 = arith.constant 0 : index
    %c0_7 = arith.constant 0 : index
    %55 = vector.load %arg4[%c0_6, %c0_7] : memref<32x1xf32, #tpu.memory_space<vmem>>, vector<32x1xf32>
    %56 = vector.broadcast %55 : vector<32x1xf32> to vector<32x128xf32>
    %57 = arith.addf %54, %56 : vector<32x128xf32>
    %cst_8 = arith.constant 0.000000e+00 : f32
    %58 = vector.broadcast %cst_8 : f32 to vector<32x128xf32>
    %59 = arith.maximumf %57, %58 : vector<32x128xf32>
    %c0_9 = arith.constant 0 : index
    %c0_10 = arith.constant 0 : index
    %60 = vector.load %arg5[%c0_9, %c0_10] : memref<8x32xf32, #tpu.memory_space<vmem>>, vector<8x32xf32>
    %cst_11 = arith.constant dense<0.000000e+00> : vector<8x128xf32>
    %61 = tpu.matmul %60, %59, %cst_11 {dimension_numbers = #tpu.dot_dimension_numbers<[1], [0], [0], [1], [0, 0, 1, 1], [], []>} : vector<8x32xf32>, vector<32x128xf32>, vector<8x128xf32> -> vector<8x128xf32>
    %c0_12 = arith.constant 0 : index
    %c0_13 = arith.constant 0 : index
    %62 = vector.load %arg6[%c0_12, %c0_13] : memref<8x1xf32, #tpu.memory_space<vmem>>, vector<8x1xf32>
    %63 = vector.broadcast %62 : vector<8x1xf32> to vector<8x128xf32>
    %64 = arith.addf %61, %63 : vector<8x128xf32>
    %65 = arith.negf %64 : vector<8x128xf32>
    %66 = math.exp %65 : vector<8x128xf32>
    %cst_14 = arith.constant 1.000000e+00 : f32
    %67 = vector.broadcast %cst_14 : f32 to vector<8x128xf32>
    %68 = arith.addf %67, %66 : vector<8x128xf32>
    %69 = arith.divf %67, %68 : vector<8x128xf32>
    %c0_15 = arith.constant 0 : index
    %c0_16 = arith.constant 0 : index
    %70 = vector.load %arg7[%c0_15, %c0_16] : memref<8x128xf32, #tpu.memory_space<vmem>>, vector<8x128xf32>
    tpu.vector_store %arg7[%c0_15, %c0_16], %69 {strides = array<i32>} : memref<8x128xf32, #tpu.memory_space<vmem>>, vector<8x128xf32>,
    return
  }
  func.func @transform_0(%arg0: i32) -> (i32, i32) {
    %c0_i32 = arith.constant 0 : i32
    %c0_i32_0 = arith.constant 0 : i32
    return %c0_i32, %arg0 : i32, i32
  }
  func.func @transform_1(%arg0: i32) -> (i32, i32) {
    %c0_i32 = arith.constant 0 : i32
    %c0_i32_0 = arith.constant 0 : i32
    return %c0_i32, %arg0 : i32, i32
  }
  func.func @transform_2(%arg0: i32) -> (i32, i32) {
    %c0_i32 = arith.constant 0 : i32
    %c0_i32_0 = arith.constant 0 : i32
    %c0_i32_1 = arith.constant 0 : i32
    return %c0_i32, %c0_i32_0 : i32, i32
  }
  func.func @transform_3(%arg0: i32) -> (i32, i32) {
    %c0_i32 = arith.constant 0 : i32
    %c0_i32_0 = arith.constant 0 : i32
    %c0_i32_1 = arith.constant 0 : i32
    return %c0_i32, %c0_i32_0 : i32, i32
  }
  func.func @transform_4(%arg0: i32) -> (i32, i32) {
    %c0_i32 = arith.constant 0 : i32
    %c0_i32_0 = arith.constant 0 : i32
    %c0_i32_1 = arith.constant 0 : i32
    return %c0_i32, %c0_i32_0 : i32, i32
  }
  func.func @transform_5(%arg0: i32) -> (i32, i32) {
    %c0_i32 = arith.constant 0 : i32
    %c0_i32_0 = arith.constant 0 : i32
    %c0_i32_1 = arith.constant 0 : i32
    return %c0_i32, %c0_i32_0 : i32, i32
  }
  func.func @transform_6(%arg0: i32) -> (i32, i32) {
    %c0_i32 = arith.constant 0 : i32
    %c0_i32_0 = arith.constant 0 : i32
    return %c0_i32, %arg0 : i32, i32
  }
}

</mosaic_0001>

<llo_original>
// kernel: embedding_bag_model_v2.1
$region0: #{embedding_bag_model_v2.1}
  #allocation0 [shape = 'u32[]', space=smem, size = 0x4, offset = 0x4, fixed_abs, tag = 'smem constant byte address 0x4 - core index']
  #allocation1 [shape = 'u32[144,128]{1,0:T(1,128)}', space=vmem, size = 0x12000, scoped, tag = 'internal scratch']
  %s0 = inlined_call_operand.vmem [shape: f32[64,128], index: 0, kind: input, shape index: {}]
  %s1 = inlined_call_operand.vmem [shape: s32[8,128], index: 1, kind: input, shape index: {}]
  %s2 = inlined_call_operand.vmem [shape: f32[32,96], index: 2, kind: input, shape index: {}]
  %s3 = inlined_call_operand.vmem [shape: f32[32,1], index: 3, kind: input, shape index: {}]
  %s4 = inlined_call_operand.vmem [shape: f32[8,32], index: 4, kind: input, shape index: {}]
  %s5 = inlined_call_operand.vmem [shape: f32[8,1], index: 5, kind: input, shape index: {}]
  %s6 = inlined_call_operand.hbm [shape: f32[8,128], index: 6, kind: output, shape index: {}]
  %s7 = sld [smem:[#allocation0]]
  $region34: #{embedding_bag_model_v2.1} parent=0
    _
  %s9 = ssub.s32 1, %s7
  %s10 = scalar_select 0, %s9, %s7
  $region1: #{embedding_bag_model_v2.1} parent=0
    #allocation2 [shape = 'u8[4096]{0}', space=vmem, size = 0x1000, scoped, tag = 'output window, operand 0, single buffered']
    #allocation3 [shape = 's32[1]{0}', space=sflag, size = 0x4, scoped, tag = 'scoped memory for embedding_bag_model_v2.1']
    %11 = vsyncpa [#allocation3], 0
    // Predicated region
    $region2: #{embedding_bag_model_v2.1} parent=1 // pred_check
      _
    $region3: #{embedding_bag_model_v2.1} parent=1 // pred_check_branch
      %13 = sbr.rel (0) target = $region5
    $region4: #{embedding_bag_model_v2.1} parent=1 // pred_region
      _
    $region5: #{embedding_bag_model_v2.1} parent=1 // pred_fallthru
      _
    // Predicated region
    $region6: #{embedding_bag_model_v2.1} parent=1 // pred_check
      _
    $region7: #{embedding_bag_model_v2.1} parent=1 // pred_check_branch
      %15 = sbr.rel (0) target = $region9
    $region8: #{embedding_bag_model_v2.1} parent=1 // pred_region
      _
    $region9: #{embedding_bag_model_v2.1} parent=1 // pred_fallthru
      _
    // Predicated region
    $region10: #{embedding_bag_model_v2.1} parent=1 // pred_check
      _
    $region11: #{embedding_bag_model_v2.1} parent=1 // pred_check_branch
      %17 = sbr.rel (0) target = $region13
    $region12: #{embedding_bag_model_v2.1} parent=1 // pred_region
      _
    $region13: #{embedding_bag_model_v2.1} parent=1 // pred_fallthru
      _
    // Predicated region
    $region14: #{embedding_bag_model_v2.1} parent=1 // pred_check
      _
    $region15: #{embedding_bag_model_v2.1} parent=1 // pred_check_branch
      %19 = sbr.rel (0) target = $region17
    $region16: #{embedding_bag_model_v2.1} parent=1 // pred_region
      _
    $region17: #{embedding_bag_model_v2.1} parent=1 // pred_fallthru
      _
    // Predicated region
    $region18: #{embedding_bag_model_v2.1} parent=1 // pred_check
      _
    $region19: #{embedding_bag_model_v2.1} parent=1 // pred_check_branch
      %21 = sbr.rel (0) target = $region21
    $region20: #{embedding_bag_model_v2.1} parent=1 // pred_region
      _
    $region21: #{embedding_bag_model_v2.1} parent=1 // pred_fallthru
      _
    // Predicated region
    $region22: #{embedding_bag_model_v2.1} parent=1 // pred_check
      _
    $region23: #{embedding_bag_model_v2.1} parent=1 // pred_check_branch
      %23 = sbr.rel (0) target = $region25
    $region24: #{embedding_bag_model_v2.1} parent=1 // pred_region
      _
    $region25: #{embedding_bag_model_v2.1} parent=1 // pred_fallthru
      _
    %v24 = vld [vmem:[%s1] sm:$0xff]
    %v25 = vlaneseq
    %v26 = vshrl.u32 %v25, 7
    %v27 = vadd.s32 %v26, 8
    %v28 = vadd.s32 %v26, 16
    %v29 = vadd.s32 %v26, 24
    %v30 = vlaneseq
    %v31 = vshrl.u32 %v30, 7
    %v32 = vsub.s32 0, %v31
    %v33 = vrot.slane %v24, %v32
    %vm34 = vcmp.eq.s32.totalorder %v26, %v33
    %vm35 = vcmp.eq.s32.totalorder %v27, %v33
    %vm36 = vcmp.eq.s32.totalorder %v28, %v33
    %vm37 = vcmp.eq.s32.totalorder %v29, %v33
    %v38 = vsel %vm34, 1, 0
    %v39 = vsel %vm35, 1, 0
    %v40 = vsel %vm36, 1, 0
    %v41 = vsel %vm37, 1, 0
    %v42 = vcvt.s32.f32 %v38
    %v43 = vcvt.s32.f32 %v39
    %v44 = vcvt.s32.f32 %v40
    %v45 = vcvt.s32.f32 %v41
    %v46 = vadd.f32 %v42, 0.0
    %v47 = vadd.f32 %v43, 0.0
    %v48 = vadd.f32 %v44, 0.0
    %v49 = vadd.f32 %v45, 0.0
    %v50 = vlaneseq
    %v51 = vshrl.u32 %v50, 7
    %v52 = vsub.s32 1, %v51
    %v53 = vrot.slane %v24, %v52
    %vm54 = vcmp.eq.s32.totalorder %v26, %v53
    %vm55 = vcmp.eq.s32.totalorder %v27, %v53
    %vm56 = vcmp.eq.s32.totalorder %v28, %v53
    %vm57 = vcmp.eq.s32.totalorder %v29, %v53
    %v58 = vsel %vm54, 1, 0
    %v59 = vsel %vm55, 1, 0
    %v60 = vsel %vm56, 1, 0
    %v61 = vsel %vm57, 1, 0
    %v62 = vcvt.s32.f32 %v58
    %v63 = vcvt.s32.f32 %v59
    %v64 = vcvt.s32.f32 %v60
    %v65 = vcvt.s32.f32 %v61
    %v66 = vadd.f32 %v46, %v62
    %v67 = vadd.f32 %v47, %v63
    %v68 = vadd.f32 %v48, %v64
    %v69 = vadd.f32 %v49, %v65
    %v70 = vlaneseq
    %v71 = vshrl.u32 %v70, 7
    %v72 = vsub.s32 2, %v71
    %v73 = vrot.slane %v24, %v72
    %vm74 = vcmp.eq.s32.totalorder %v26, %v73
    %vm75 = vcmp.eq.s32.totalorder %v27, %v73
    %vm76 = vcmp.eq.s32.totalorder %v28, %v73
    %vm77 = vcmp.eq.s32.totalorder %v29, %v73
    %v78 = vsel %vm74, 1, 0
    %v79 = vsel %vm75, 1, 0
    %v80 = vsel %vm76, 1, 0
    %v81 = vsel %vm77, 1, 0
    %v82 = vcvt.s32.f32 %v78
    %v83 = vcvt.s32.f32 %v79
    %v84 = vcvt.s32.f32 %v80
    %v85 = vcvt.s32.f32 %v81
    %v86 = vadd.f32 %v66, %v82
    %v87 = vadd.f32 %v67, %v83
    %v88 = vadd.f32 %v68, %v84
    %v89 = vadd.f32 %v69, %v85
    %v90 = vlaneseq
    %v91 = vshrl.u32 %v90, 7
    %v92 = vsub.s32 3, %v91
    %v93 = vrot.slane %v24, %v92
    %vm94 = vcmp.eq.s32.totalorder %v26, %v93
    %vm95 = vcmp.eq.s32.totalorder %v27, %v93
    %vm96 = vcmp.eq.s32.totalorder %v28, %v93
    %vm97 = vcmp.eq.s32.totalorder %v29, %v93
    %v98 = vsel %vm94, 1, 0
    %v99 = vsel %vm95, 1, 0
    %v100 = vsel %vm96, 1, 0
    %v101 = vsel %vm97, 1, 0
    %v102 = vcvt.s32.f32 %v98
    %v103 = vcvt.s32.f32 %v99
    %v104 = vcvt.s32.f32 %v100
    %v105 = vcvt.s32.f32 %v101
    %v106 = vadd.f32 %v86, %v102
    %v107 = vadd.f32 %v87, %v103
    %v108 = vadd.f32 %v88, %v104
    %v109 = vadd.f32 %v89, %v105
    %v110 = vlaneseq
    %v111 = vshrl.u32 %v110, 7
    %v112 = vsub.s32 4, %v111
    %v113 = vrot.slane %v24, %v112
    %vm114 = vcmp.eq.s32.totalorder %v26, %v113
    %vm115 = vcmp.eq.s32.totalorder %v27, %v113
    %vm116 = vcmp.eq.s32.totalorder %v28, %v113
    %vm117 = vcmp.eq.s32.totalorder %v29, %v113
    %v118 = vsel %vm114, 1, 0
    %v119 = vsel %vm115, 1, 0
    %v120 = vsel %vm116, 1, 0
    %v121 = vsel %vm117, 1, 0
    %v122 = vcvt.s32.f32 %v118
    %v123 = vcvt.s32.f32 %v119
    %v124 = vcvt.s32.f32 %v120
    %v125 = vcvt.s32.f32 %v121
    %v126 = vadd.f32 %v106, %v122
    %v127 = vadd.f32 %v107, %v123
    %v128 = vadd.f32 %v108, %v124
    %v129 = vadd.f32 %v109, %v125
    %v130 = vlaneseq
    %v131 = vshrl.u32 %v130, 7
    %v132 = vsub.s32 5, %v131
    %v133 = vrot.slane %v24, %v132
    %vm134 = vcmp.eq.s32.totalorder %v26, %v133
    %vm135 = vcmp.eq.s32.totalorder %v27, %v133
    %vm136 = vcmp.eq.s32.totalorder %v28, %v133
    %vm137 = vcmp.eq.s32.totalorder %v29, %v133
    %v138 = vsel %vm134, 1, 0
    %v139 = vsel %vm135, 1, 0
    %v140 = vsel %vm136, 1, 0
    %v141 = vsel %vm137, 1, 0
    %v142 = vcvt.s32.f32 %v138
    %v143 = vcvt.s32.f32 %v139
    %v144 = vcvt.s32.f32 %v140
    %v145 = vcvt.s32.f32 %v141
    %v146 = vadd.f32 %v126, %v142
    %v147 = vadd.f32 %v127, %v143
    %v148 = vadd.f32 %v128, %v144
    %v149 = vadd.f32 %v129, %v145
    %v150 = vlaneseq
    %v151 = vshrl.u32 %v150, 7
    %v152 = vsub.s32 6, %v151
    %v153 = vrot.slane %v24, %v152
    %vm154 = vcmp.eq.s32.totalorder %v26, %v153
    %vm155 = vcmp.eq.s32.totalorder %v27, %v153
    %vm156 = vcmp.eq.s32.totalorder %v28, %v153
    %vm157 = vcmp.eq.s32.totalorder %v29, %v153
    %v158 = vsel %vm154, 1, 0
    %v159 = vsel %vm155, 1, 0
    %v160 = vsel %vm156, 1, 0
    %v161 = vsel %vm157, 1, 0
    %v162 = vcvt.s32.f32 %v158
    %v163 = vcvt.s32.f32 %v159
    %v164 = vcvt.s32.f32 %v160
    %v165 = vcvt.s32.f32 %v161
    %v166 = vadd.f32 %v146, %v162
    %v167 = vadd.f32 %v147, %v163
    %v168 = vadd.f32 %v148, %v164
    %v169 = vadd.f32 %v149, %v165
    %v170 = vlaneseq
    %v171 = vshrl.u32 %v170, 7
    %v172 = vsub.s32 7, %v171
    %v173 = vrot.slane %v24, %v172
    %vm174 = vcmp.eq.s32.totalorder %v26, %v173
    %vm175 = vcmp.eq.s32.totalorder %v27, %v173
    %vm176 = vcmp.eq.s32.totalorder %v28, %v173
    %vm177 = vcmp.eq.s32.totalorder %v29, %v173
    %v178 = vsel %vm174, 1, 0
    %v179 = vsel %vm175, 1, 0
    %v180 = vsel %vm176, 1, 0
    %v181 = vsel %vm177, 1, 0
    %v182 = vcvt.s32.f32 %v178
    %v183 = vcvt.s32.f32 %v179
    %v184 = vcvt.s32.f32 %v180
    %v185 = vcvt.s32.f32 %v181
    %v186 = vadd.f32 %v166, %v182
    %v187 = vadd.f32 %v167, %v183
    %v188 = vadd.f32 %v168, %v184
    %v189 = vadd.f32 %v169, %v185
    %v190 = vld [vmem:[%s0] sm:$0xff]
    %v191 = vld [vmem:[%s0 + $0x8] sm:$0xff]
    %v192 = vld [vmem:[%s0 + $0x10] sm:$0xff]
    %v193 = vld [vmem:[%s0 + $0x18] sm:$0xff]
    %v194 = vld [vmem:[%s0 + $0x20] sm:$0xff]
    %v195 = vld [vmem:[%s0 + $0x28] sm:$0xff]
    %v196 = vld [vmem:[%s0 + $0x30] sm:$0xff]
    %v197 = vld [vmem:[%s0 + $0x38] sm:$0xff]
    %v198 = vld [vmem:[%s2] sm:$0xff]
    %v199 = vld [vmem:[%s2 + $0x8] sm:$0xff]
    %v200 = vld [vmem:[%s2 + $0x10] sm:$0xff]
    %v201 = vld [vmem:[%s2 + $0x18] sm:$0xff]
    %v202 = vld [vmem:[%s3] sm:$0xff]
    %v203 = vld [vmem:[%s3 + $0x8] sm:$0xff]
    %v204 = vld [vmem:[%s3 + $0x10] sm:$0xff]
    %v205 = vld [vmem:[%s3 + $0x18] sm:$0xff]
    %207 = vset.pattern.permute.xlu0 0
    %208 = vperm.xlu0 %207, %v202
    %v209 = vpop.permute.xlu0 %208
    %212 = vset.pattern.permute.xlu0 0
    %213 = vperm.xlu0 %212, %v203
    %v214 = vpop.permute.xlu0 %213
    %217 = vset.pattern.permute.xlu0 0
    %218 = vperm.xlu0 %217, %v204
    %v219 = vpop.permute.xlu0 %218
    %222 = vset.pattern.permute.xlu0 0
    %223 = vperm.xlu0 %222, %v205
    %v224 = vpop.permute.xlu0 %223
    %vm226 = vcmask 785408
    %v228 = vsel %vm226, %v198, 0
    %v231 = vsel %vm226, %v199, 0
    %v234 = vsel %vm226, %v200, 0
    %v237 = vsel %vm226, %v201, 0
    %239 = vmatprep.subr.mxu0 0.0
    %240 = vmatpush1.msra.mxu0 %v190
    %241 = vmatprep.subr.mxu0 0.0
    %242 = vmatpush1.msra.mxu0 %v191
    %243 = vmatprep.subr.mxu0 0.0
    %244 = vmatpush1.msra.mxu0 %v192
    %245 = vmatprep.subr.mxu0 0.0
    %246 = vmatpush1.msra.mxu0 %v193
    %247 = vmatprep.subr.mxu0 0.0
    %248 = vmatpush1.msra.mxu0 %v194
    %249 = vmatprep.subr.mxu0 0.0
    %250 = vmatpush1.msra.mxu0 %v195
    %251 = vmatprep.subr.mxu0 0.0
    %252 = vmatpush1.msra.mxu0 %v196
    %253 = vmatprep.subr.mxu0 0.0
    %254 = vmatpush1.msra.mxu0 %v197
    %255 = vmatprep.subr.mxu0 0.0
    %256 = vmatpush1.msra.mxu0 %v186
    %257 = vmatprep.subr.mxu0 0.0
    %258 = vmatpush1.msra.mxu0 %v187
    %259 = vmatprep.subr.mxu0 0.0
    %260 = vmatpush1.msra.mxu0 %v188
    %261 = vmatprep.subr.mxu0 0.0
    %262 = vmatpush1.msra.mxu0 %v189
    %263 = vmatprep.subr.mxu0 0.0
    %264 = vmatpush1.msra.mxu0 0.0
    %265 = vmatprep.subr.mxu0 0.0
    %266 = vmatpush1.msra.mxu0 0.0
    %267 = vmatprep.subr.mxu0 0.0
    %268 = vmatpush1.msra.mxu0 0.0
    %269 = vmatprep.subr.mxu0 0.0
    %270 = vmatpush1.msra.mxu0 0.0
    %271 = vmatprep.subr.mxu0 0.0
    %272 = vmatpush1.msra.mxu0 0.0
    %273 = vmatprep.subr.mxu0 0.0
    %274 = vmatpush1.msra.mxu0 0.0
    %275 = vmatprep.subr.mxu0 0.0
    %276 = vmatpush1.msra.mxu0 0.0
    %277 = vmatprep.subr.mxu0 0.0
    %278 = vmatpush1.msra.mxu0 0.0
    %279 = vmatprep.subr.mxu0 0.0
    %280 = vmatpush1.msra.mxu0 0.0
    %281 = vmatprep.subr.mxu0 0.0
    %282 = vmatpush1.msra.mxu0 0.0
    %283 = vmatprep.subr.mxu0 0.0
    %284 = vmatpush1.msra.mxu0 0.0
    %285 = vmatprep.subr.mxu0 0.0
    %286 = vmatpush1.msra.mxu0 0.0
    %287 = vmatprep.subr.mxu0 0.0
    %288 = vmatpush1.msra.mxu0 0.0
    %289 = vmatprep.subr.mxu0 0.0
    %290 = vmatpush1.msra.mxu0 0.0
    %291 = vmatprep.subr.mxu0 0.0
    %292 = vmatpush1.msra.mxu0 0.0
    %293 = vmatprep.subr.mxu0 0.0
    %294 = vmatpush1.msra.mxu0 0.0
    %295 = vmatprep.subr.mxu0 0.0
    %296 = vmatpush1.msra.mxu0 0.0
    %297 = vmatprep.subr.mxu0 0.0
    %298 = vmatpush1.msra.mxu0 0.0
    %299 = vmatprep.subr.mxu0 0.0
    %300 = vmatpush1.msra.mxu0 0.0
    %301 = vmatprep.subr.mxu0 0.0
    %302 = vmatpush1.msra.mxu0 0.0
    %303 = vmatprep.mubr.f32.mxu0 0.0
    %304 = vmatmul.mubr.f32.gmra.mrb[0].mxu0 %v228
    %v305 = vpop.f32.mrb[0].mxu0
    %v306 = vadd.f32 %v209, %v305
    %v307 = vpop.f32.mrb[0].mxu0
    %308 = vmatprep.mubr.f32.mxu0 0.0
    %309 = vmatmul.mubr.f32.gmra.mrb[0].mxu0 %v231
    %v310 = vpop.f32.mrb[0].mxu0
    %v311 = vadd.f32 %v214, %v310
    %v312 = vpop.f32.mrb[0].mxu0
    %313 = vmatprep.mubr.f32.mxu0 0.0
    %314 = vmatmul.mubr.f32.gmra.mrb[0].mxu0 %v234
    %v315 = vpop.f32.mrb[0].mxu0
    %v316 = vadd.f32 %v219, %v315
    %v317 = vpop.f32.mrb[0].mxu0
    %318 = vmatprep.mubr.f32.mxu0 0.0
    %319 = vmatmul.mubr.f32.gmra.mrb[0].mxu0 %v237
    %v320 = vpop.f32.mrb[0].mxu0
    %v321 = vadd.f32 %v224, %v320
    %v322 = vpop.f32.mrb[0].mxu0
    %323 = vdwg.mxu0
    %v324 = vmax.f32 %v306, 0.0
    %v325 = vmax.f32 %v311, 0.0
    %v326 = vmax.f32 %v316, 0.0
    %v327 = vmax.f32 %v321, 0.0
    %v328 = vld [vmem:[%s4] sm:$0xff]
    %v329 = vld [vmem:[%s5] sm:$0xff]
    %331 = vset.pattern.permute.xlu0 0
    %332 = vperm.xlu0 %331, %v329
    %v333 = vpop.permute.xlu0 %332
    %vm335 = vcmask 261120
    %v337 = vsel %vm335, %v328, 0
    %339 = vmatprep.subr.mxu0 0.0
    %340 = vmatpush1.msra.mxu0 %v324
    %341 = vmatprep.subr.mxu0 0.0
    %342 = vmatpush1.msra.mxu0 %v325
    %343 = vmatprep.subr.mxu0 0.0
    %344 = vmatpush1.msra.mxu0 %v326
    %345 = vmatprep.subr.mxu0 0.0
    %346 = vmatpush1.msra.mxu0 %v327
    %347 = vmatprep.subr.mxu0 0.0
    %348 = vmatpush1.msra.mxu0 0.0
    %349 = vmatprep.subr.mxu0 0.0
    %350 = vmatpush1.msra.mxu0 0.0
    %351 = vmatprep.subr.mxu0 0.0
    %352 = vmatpush1.msra.mxu0 0.0
    %353 = vmatprep.subr.mxu0 0.0
    %354 = vmatpush1.msra.mxu0 0.0
    %355 = vmatprep.subr.mxu0 0.0
    %356 = vmatpush1.msra.mxu0 0.0
    %357 = vmatprep.subr.mxu0 0.0
    %358 = vmatpush1.msra.mxu0 0.0
    %359 = vmatprep.subr.mxu0 0.0
    %360 = vmatpush1.msra.mxu0 0.0
    %361 = vmatprep.subr.mxu0 0.0
    %362 = vmatpush1.msra.mxu0 0.0
    %363 = vmatprep.subr.mxu0 0.0
    %364 = vmatpush1.msra.mxu0 0.0
    %365 = vmatprep.subr.mxu0 0.0
    %366 = vmatpush1.msra.mxu0 0.0
    %367 = vmatprep.subr.mxu0 0.0
    %368 = vmatpush1.msra.mxu0 0.0
    %369 = vmatprep.subr.mxu0 0.0
    %370 = vmatpush1.msra.mxu0 0.0
    %371 = vmatprep.subr.mxu0 0.0
    %372 = vmatpush1.msra.mxu0 0.0
    %373 = vmatprep.subr.mxu0 0.0
    %374 = vmatpush1.msra.mxu0 0.0
    %375 = vmatprep.subr.mxu0 0.0
    %376 = vmatpush1.msra.mxu0 0.0
    %377 = vmatprep.subr.mxu0 0.0
    %378 = vmatpush1.msra.mxu0 0.0
    %379 = vmatprep.subr.mxu0 0.0
    %380 = vmatpush1.msra.mxu0 0.0
    %381 = vmatprep.subr.mxu0 0.0
    %382 = vmatpush1.msra.mxu0 0.0
    %383 = vmatprep.subr.mxu0 0.0
    %384 = vmatpush1.msra.mxu0 0.0
    %385 = vmatprep.subr.mxu0 0.0
    %386 = vmatpush1.msra.mxu0 0.0
    %387 = vmatprep.subr.mxu0 0.0
    %388 = vmatpush1.msra.mxu0 0.0
    %389 = vmatprep.subr.mxu0 0.0
    %390 = vmatpush1.msra.mxu0 0.0
    %391 = vmatprep.subr.mxu0 0.0
    %392 = vmatpush1.msra.mxu0 0.0
    %393 = vmatprep.subr.mxu0 0.0
    %394 = vmatpush1.msra.mxu0 0.0
    %395 = vmatprep.subr.mxu0 0.0
    %396 = vmatpush1.msra.mxu0 0.0
    %397 = vmatprep.subr.mxu0 0.0
    %398 = vmatpush1.msra.mxu0 0.0
    %399 = vmatprep.subr.mxu0 0.0
    %400 = vmatpush1.msra.mxu0 0.0
    %401 = vmatprep.subr.mxu0 0.0
    %402 = vmatpush1.msra.mxu0 0.0
    %403 = vmatprep.mubr.f32.mxu0 0.0
    %404 = vmatmul.mubr.f32.gmra.mrb[0].mxu0 %v337
    %v405 = vpop.f32.mrb[0].mxu0
    %v406 = vadd.f32 %v333, %v405
    %v407 = vpop.f32.mrb[0].mxu0
    %408 = vdwg.mxu0
    %v409 = vxor.u32 %v406, 2147483648
    %v410 = vmul.f32 %v409, 1.442695
    %v411 = vpow.pop %v410
    %v412 = vadd.f32 %v411, 1.0
    %v413 = vrcp.pop %v412
    %v414 = vmul.f32 1.0, %v413
    %415 = vst [vmem:[#allocation2] sm:$0xff] %v414
    // Predicated region
    $region26: #{embedding_bag_model_v2.1} parent=1 // pred_check
      _
    $region27: #{embedding_bag_model_v2.1} parent=1 // pred_check_branch
      %417 = sbr.rel (0) target = $region29
    $region28: #{embedding_bag_model_v2.1} parent=1 // pred_region
      %s419 = ssub.s32 128, 128
      %420 = vsyncadd [#allocation3], %s419
      %s422 = sshll.u32 [#allocation2], 4
      %s423 = int_to_ptr.vmem [resolvable:$true] %s422
      %425 = dma.vmem_to_hbm [thread:$0]  %s423, 128, %s6, [#allocation3]
    $region29: #{embedding_bag_model_v2.1} parent=1 // pred_fallthru
      _
    // Predicated region
    $region30: #{embedding_bag_model_v2.1} parent=1 // pred_check
      _
    $region31: #{embedding_bag_model_v2.1} parent=1 // pred_check_branch
      %427 = sbr.rel (0) target = $region33
    $region32: #{embedding_bag_model_v2.1} parent=1 // pred_region
      %428 = dma.done [#allocation3], 128
    $region33: #{embedding_bag_model_v2.1} parent=1 // pred_fallthru
      _
    %429 = vsyncpa [#allocation3], 1

</llo_original>
